<compile_context>
chip_gen: v7x
topology: tpu7x:2x2x1
jax: 0.10.0
libtpu: 0.0.40
codegen_flags: <defaults>
</compile_context>

<pallas_src>
import functools

import jax
import jax.numpy as jnp
from jax.experimental import pallas as pl
from jax.experimental.pallas import tpu as pltpu

LANE = 128


def _round_up(v, m):
    return ((v + m - 1) // m) * m


# ---------------------------------------------------------------------------
# Feature probe: single-buffering of grid-invariant operands (pl.Buffered(1)).
# ---------------------------------------------------------------------------
def _probe_kernel(x_ref, o_ref):
    o_ref[...] = x_ref[...] * 2.0


@functools.lru_cache(maxsize=1)
def _buffered_supported():
    try:
        fn = pl.pallas_call(
            _probe_kernel,
            out_shape=jax.ShapeDtypeStruct((8, LANE), jnp.float32),
            grid=(2,),
            in_specs=[pl.BlockSpec((8, LANE), lambda i: (0, 0),
                                   pipeline_mode=pl.Buffered(1))],
            out_specs=pl.BlockSpec((8, LANE), lambda i: (0, 0)),
        )
        jax.block_until_ready(fn(jnp.zeros((8, LANE), jnp.float32)))
        return True
    except Exception:
        return False


def _invariant_spec(block_shape, index_map):
    """BlockSpec for operands whose block index never changes across the grid:
    single-buffer them (halves their VMEM footprint) when supported."""
    if _buffered_supported():
        return pl.BlockSpec(block_shape, index_map, pipeline_mode=pl.Buffered(1))
    return pl.BlockSpec(block_shape, index_map)


# ---------------------------------------------------------------------------
# Generation-aware tiling / VMEM budgeting
# ---------------------------------------------------------------------------
def pick_tile_rows(num_nodes, requested=None):
    """dst-node tile rows (multiple of 16 for bf16 sublane packing); the target
    is halved on v7x (64 MiB VMEM vs 128 MiB on v5e/v6e)."""
    if requested is not None:
        return max(16, _round_up(requested, 16))
    try:
        vmem = pltpu.get_tpu_info().vmem_capacity_bytes
    except Exception:
        vmem = 128 << 20
    target = 512 if vmem >= (100 << 20) else 256
    return min(target, max(16, _round_up(num_nodes, 16)))


def _conv_vmem_limit(n_pad, f_pad, tile_rows, num_bases):
    a_tile = 2 * tile_rows * n_pad * 2                   # double-buffered bf16 A tile
    x_full = n_pad * f_pad * 2                           # resident bf16 activations
    weights = (num_bases + 1) * f_pad * f_pad * 2 + f_pad * 4
    acc = num_bases * tile_rows * f_pad * 4              # per-basis f32 scratch
    outs = 2 * (tile_rows * f_pad * 4 + 2 * f_pad * 4)   # h + stats output buffers
    est = a_tile + x_full + weights + acc + outs
    # generous headroom, never below the 32 MiB default, stay under v7x's 64 MiB
    return int(min(max(2 * est + (4 << 20), 32 << 20), 60 << 20))


# ---------------------------------------------------------------------------
# Kernel 1: packed per-node-type input projection + relu, tiled over nodes.
# ---------------------------------------------------------------------------
def _proj_kernel(x_ref, w_ref, o_ref):
    y = jnp.dot(x_ref[...], w_ref[...], preferred_element_type=jnp.float32)
    o_ref[...] = jnp.maximum(y, 0.0).astype(o_ref.dtype)


def fused_input_projection(x_packed, w_packed, tile_rows):
    n_pad, d_in = x_packed.shape
    d_out = w_packed.shape[1]
    return pl.pallas_call(
        _proj_kernel,
        out_shape=jax.ShapeDtypeStruct((n_pad, d_out), jnp.bfloat16),
        grid=(n_pad // tile_rows,),
        in_specs=[pl.BlockSpec((tile_rows, d_in), lambda i: (i, 0)),
                  _invariant_spec((d_in, d_out), lambda i: (0, 0))],   # resident weight
        out_specs=pl.BlockSpec((tile_rows, d_out), lambda i: (i, 0)),
        compiler_params=pltpu.CompilerParams(dimension_semantics=("parallel",)),
    )(x_packed, w_packed)


def pack_input_projection(x_dict, proj_params, node_types, f_pad, n_pad):
    """Block-diagonal packing of the per-type projections (bias folded in via a
    per-type ones column) into one lane-dense bf16 matmul."""
    col_sizes = [x_dict[nt].shape[1] + 1 for nt in node_types]
    total_cols = sum(col_sizes)
    in_pad = _round_up(total_cols, LANE)
    rows, w_blocks = [], []
    off = 0
    for nt, csz in zip(node_types, col_sizes):
        x = x_dict[nt]
        n_t, d_t = x.shape
        row = jnp.zeros((n_t, in_pad), jnp.float32)
        row = row.at[:, off:off + d_t].set(x)
        row = row.at[:, off + d_t].set(1.0)            # bias column
        rows.append(row)
        w_t, b_t = proj_params[nt]                      # (d_t, H), (H,)
        blk = jnp.zeros((csz, f_pad), jnp.float32)
        blk = blk.at[:d_t, :w_t.shape[1]].set(w_t)
        blk = blk.at[d_t, :b_t.shape[0]].set(b_t)
        w_blocks.append(blk)
        off += csz
    x_packed = jnp.concatenate(rows, axis=0)
    x_packed = jnp.pad(x_packed, ((0, n_pad - x_packed.shape[0]), (0, 0)))
    w_packed = jnp.concatenate(w_blocks, axis=0)
    w_packed = jnp.pad(w_packed, ((0, in_pad - total_cols), (0, 0)))
    return x_packed.astype(jnp.bfloat16), w_packed.astype(jnp.bfloat16)


# ---------------------------------------------------------------------------
# Kernel 2: RGCNConv (basis decomposition, mean aggregation) + relu + per-tile
# PairNorm statistics.  Grid = (dst tiles ["parallel"], relations ["arbitrary"]).
# ---------------------------------------------------------------------------
def _rgcn_conv_kernel(x_ref, a_ref, comp_ref, basis_ref, root_ref, bias_ref,
                      h_ref, stats_ref, macc_ref, *,
                      num_bases, tile_rows, num_real_nodes, apply_relu):
    i = pl.program_id(0)                       # dst-node tile
    r = pl.program_id(1)                       # relation (reduction axis)
    f_pad = h_ref.shape[-1]

    @pl.when(r == 0)
    def _():
        macc_ref[...] = jnp.zeros_like(macc_ref)
        # root + bias accumulate directly into the resident output block
        row0 = pl.multiple_of(i * tile_rows, tile_rows)
        x_dst = x_ref[pl.ds(row0, tile_rows), :]                  # bf16 dst rows
        h_ref[...] = (jnp.dot(x_dst, root_ref[...],
                              preferred_element_type=jnp.float32)
                      + bias_ref[...])

    # Messages for relation r: bf16 counts @ bf16 x on the MXU (f32 accumulate),
    # then the exact f32 1/deg_r(dst) row scale on the VPU (hidden under the MXU).
    a = a_ref[...]                                                # (tile, n_pad) bf16 counts
    msg = jnp.dot(a, x_ref[...], preferred_element_type=jnp.float32)
    deg = jnp.sum(a.astype(jnp.float32), axis=1, keepdims=True)
    msg = msg * jnp.where(deg > 0.0, 1.0 / deg, 0.0)
    # Fold into per-basis accumulators with SMEM scalars comp[r, b]:
    # W_r = sum_b comp[r,b] * basis[b] is never materialized.
    for b in range(num_bases):
        macc_ref[b] = macc_ref[b] + comp_ref[r, b] * msg

    @pl.when(r == pl.num_programs(1) - 1)
    def _():
        # basis projections accumulate in place into the resident output block
        for b in range(num_bases):
            h_ref[...] += jnp.dot(macc_ref[b].astype(jnp.bfloat16), basis_ref[b],
                                  preferred_element_type=jnp.float32)
        h = h_ref[...]
        if apply_relu:
            h = jnp.maximum(h, 0.0)
        # zero padded dst rows so PairNorm stats over the real node count stay exact
        rows = i * tile_rows + jax.lax.broadcasted_iota(jnp.int32, (tile_rows, 1), 0)
        h = h * (rows < num_real_nodes).astype(jnp.float32)
        h_ref[...] = h
        # per-tile PairNorm statistics: row 0 = column sums, row 1 lane 0 = sum(h^2)
        col = jnp.sum(h, axis=0, keepdims=True)
        lane = jax.lax.broadcasted_iota(jnp.int32, (1, f_pad), 1)
        sq_row = jnp.where(lane == 0, jnp.sum(h * h), 0.0)
        stats_ref[...] = jnp.concatenate([col, sq_row], axis=0).reshape(1, 2, f_pad)


def rgcn_conv_layer(x, adj_counts, comp, basis, root, bias, *,
                    tile_rows, num_real_nodes, apply_relu):
    n_pad, f_pad = x.shape
    num_rel = adj_counts.shape[0]
    num_bases = basis.shape[0]
    num_tiles = n_pad // tile_rows
    kernel = functools.partial(
        _rgcn_conv_kernel, num_bases=num_bases, tile_rows=tile_rows,
        num_real_nodes=num_real_nodes, apply_relu=apply_relu)
    return pl.pallas_call(
        kernel,
        out_shape=(jax.ShapeDtypeStruct((n_pad, f_pad), jnp.float32),
                   jax.ShapeDtypeStruct((num_tiles, 2, f_pad), jnp.float32)),
        grid_spec=pltpu.PrefetchScalarGridSpec(
            num_scalar_prefetch=0,
            grid=(num_tiles, num_rel),
            in_specs=[
                _invariant_spec((n_pad, f_pad), lambda i, r: (0, 0)),        # x (full src)
                pl.BlockSpec((pl.Squeezed(), tile_rows, n_pad),
                             lambda i, r: (r, i, 0)),                        # A[r] dst tile
                pl.BlockSpec(memory_space=pltpu.MemorySpace.SMEM),           # comp scalars
                _invariant_spec((num_bases, f_pad, f_pad),
                                lambda i, r: (0, 0, 0)),                     # basis
                _invariant_spec((f_pad, f_pad), lambda i, r: (0, 0)),        # root
                _invariant_spec((1, f_pad), lambda i, r: (0, 0)),            # bias
            ],
            out_specs=(pl.BlockSpec((tile_rows, f_pad), lambda i, r: (i, 0)),
                       pl.BlockSpec((1, 2, f_pad), lambda i, r: (i, 0, 0))),
            scratch_shapes=[pltpu.VMEM((num_bases, tile_rows, f_pad), jnp.float32)],
        ),
        compiler_params=pltpu.CompilerParams(
            dimension_semantics=("parallel", "arbitrary"),
            vmem_limit_bytes=_conv_vmem_limit(n_pad, f_pad, tile_rows, num_bases)),
    )(x, adj_counts, comp, basis, root, bias)


# ---------------------------------------------------------------------------
# Kernel 3: PairNorm normalize (de-fused cross-tile node reduction), tiled and
# "parallel" over dst-node tiles; tiny per-tile stats are combined in-kernel.
# ---------------------------------------------------------------------------
def _pairnorm_kernel(h_ref, stats_ref, o_ref, *,
                     tile_rows, num_real_nodes, eps, scale):
    i = pl.program_id(0)
    stats = stats_ref[...]                               # (tiles, 2, F) f32
    row_sums = jnp.sum(stats, axis=0)                    # (2, F)
    inv_n = 1.0 / num_real_nodes
    col_mean = row_sums[0:1, :] * inv_n                  # (1, F)
    total_sq = jnp.sum(row_sums[1:2, :])
    ss = jnp.maximum(total_sq - num_real_nodes * jnp.sum(col_mean * col_mean), 0.0)
    inv_norm = jax.lax.rsqrt(eps + ss * inv_n)
    rows = i * tile_rows + jax.lax.broadcasted_iota(jnp.int32, (tile_rows, 1), 0)
    mask = (rows < num_real_nodes).astype(jnp.float32)   # re-zero padded rows
    o_ref[...] = (mask * (scale * inv_norm)
                  * (h_ref[...] - col_mean)).astype(o_ref.dtype)


def pairnorm_layer(h, stats, *, tile_rows, num_real_nodes, eps=1e-5, scale=1.0):
    n_pad, f_pad = h.shape
    num_tiles = n_pad // tile_rows
    kernel = functools.partial(_pairnorm_kernel, tile_rows=tile_rows,
                               num_real_nodes=num_real_nodes, eps=eps, scale=scale)
    return pl.pallas_call(
        kernel,
        out_shape=jax.ShapeDtypeStruct((n_pad, f_pad), jnp.bfloat16),
        grid=(num_tiles,),
        in_specs=[pl.BlockSpec((tile_rows, f_pad), lambda i: (i, 0)),
                  _invariant_spec((num_tiles, 2, f_pad), lambda i: (0, 0, 0))],
        out_specs=pl.BlockSpec((tile_rows, f_pad), lambda i: (i, 0)),
        compiler_params=pltpu.CompilerParams(dimension_semantics=("parallel",)),
    )(h, stats)


# ---------------------------------------------------------------------------
# Glue (graph densification, parameter plumbing)
# ---------------------------------------------------------------------------
def build_relation_adjacency_counts(edge_index, edge_type, num_nodes_padded,
                                    num_relations):
    """A[r, dst, src] = #edges src->dst of type r, stored as bf16 (small counts
    are exact).  Mean normalization (1/deg_r(dst)) is applied in-kernel in f32."""
    src, dst = edge_index[0], edge_index[1]
    a = jnp.zeros((num_relations, num_nodes_padded, num_nodes_padded), jnp.float32)
    a = a.at[edge_type, dst, src].add(1.0)
    return a.astype(jnp.bfloat16)


def pairnorm_rgcn_forward(x_dict, params, edge_index, edge_type, num_relations,
                          node_types, hidden_dim, out_dim, *, tile_rows=None,
                          eps=1e-5, scale=1.0):
    num_nodes = sum(int(x_dict[nt].shape[0]) for nt in node_types)
    f_pad = _round_up(max(hidden_dim, out_dim), LANE)
    t = pick_tile_rows(num_nodes, tile_rows)
    n_pad = _round_up(num_nodes, t)

    adj_counts = build_relation_adjacency_counts(edge_index, edge_type, n_pad,
                                                 num_relations)

    # per-node-type projection + relu as a single packed lane-dense bf16 matmul
    # (dropout == identity in eval mode)
    x_packed, w_packed = pack_input_projection(x_dict, params["proj"], node_types,
                                               f_pad, n_pad)
    x = fused_input_projection(x_packed, w_packed, t)     # (n_pad, f_pad) bf16

    x_latents = [x]
    convs = params["convs"]
    for li, (comp, basis, root, bias) in enumerate(convs):
        is_last = li == len(convs) - 1
        _, f_in, f_out = basis.shape
        basis_p = jnp.pad(basis, ((0, 0), (0, f_pad - f_in),
                                  (0, f_pad - f_out))).astype(jnp.bfloat16)
        root_p = jnp.pad(root, ((0, f_pad - f_in),
                                (0, f_pad - f_out))).astype(jnp.bfloat16)
        bias_p = jnp.pad(bias, (0, f_pad - f_out)).reshape(1, f_pad).astype(jnp.float32)
        h, stats = rgcn_conv_layer(x, adj_counts, comp.astype(jnp.float32),
                                   basis_p, root_p, bias_p,
                                   tile_rows=t, num_real_nodes=num_nodes,
                                   apply_relu=not is_last)
        x = pairnorm_layer(h, stats, tile_rows=t, num_real_nodes=num_nodes,
                           eps=eps, scale=scale)
        if not is_last:
            x_latents.append(x)

    out = x[:num_nodes, :out_dim].astype(jnp.float32)
    lats = [lat[:num_nodes, :hidden_dim].astype(jnp.float32) for lat in x_latents]
    return out, lats


# ---------------------------------------------------------------------------
# Pure-JAX f32 reference (for the correctness check against the fused kernels)
# ---------------------------------------------------------------------------
def reference_forward(x_dict, params, edge_index, edge_type, num_relations,
                      node_types, hidden_dim, out_dim, eps=1e-5, scale=1.0):
    xs = []
    for nt in node_types:
        w, b = params["proj"][nt]
        xs.append(jnp.maximum(x_dict[nt] @ w + b, 0.0))
    x = jnp.concatenate(xs, axis=0)
    n = x.shape[0]
    src, dst = edge_index[0], edge_index[1]
    a = jnp.zeros((num_relations, n, n), jnp.float32).at[edge_type, dst, src].add(1.0)
    deg = a.sum(axis=2, keepdims=True)
    adj = a / jnp.where(deg > 0, deg, 1.0)
    lats = [x]
    convs = params["convs"]
    for li, (comp, basis, root, bias) in enumerate(convs):
        w_rel = jnp.einsum("rb,bio->rio", comp, basis)
        msg = jnp.einsum("rij,jf,rfo->io", adj, x, w_rel)
        h = x @ root + bias + msg
        if li < len(convs) - 1:
            h = jnp.maximum(h, 0.0)
        hc = h - h.mean(axis=0, keepdims=True)
        x = scale * hc / jnp.sqrt(eps + (hc * hc).sum(axis=1).mean())
        if li < len(convs) - 1:
            lats.append(x)
    return x, lats


# ---------------------------------------------------------------------------
# Main
# ---------------------------------------------------------------------------
if __name__ == "__main__":
    key = jax.random.PRNGKey(0)
    keys = jax.random.split(key, 16)

    node_types = ("author", "paper")
    edge_types = (("author", "writes", "paper"),
                  ("paper", "rev_writes", "author"),
                  ("paper", "cites", "paper"))
    num_relations = len(edge_types)
    hidden_dim, out_dim, num_bases, num_layers = 32, 16, 2, 2

    n_author, n_paper = 10, 14
    num_nodes = n_author + n_paper
    in_dims = {"author": 12, "paper": 20}

    # deterministic synthetic inputs
    x_dict = {
        "author": jax.random.normal(keys[0], (n_author, in_dims["author"]),
                                    jnp.float32),
        "paper": jax.random.normal(keys[1], (n_paper, in_dims["paper"]),
                                   jnp.float32),
    }

    # deterministic homogeneous edge_index / edge_type
    # (author nodes 0..9, paper nodes 10..23)
    a_idx = jnp.arange(n_author)
    p_idx = jnp.arange(n_paper)
    src0, dst0 = a_idx, n_author + (a_idx % n_paper)                   # writes
    src1, dst1 = n_author + p_idx, p_idx % n_author                    # rev_writes
    src2, dst2 = n_author + p_idx, n_author + ((p_idx + 1) % n_paper)  # cites
    edge_index = jnp.stack([jnp.concatenate([src0, src1, src2]),
                            jnp.concatenate([dst0, dst1, dst2])])
    edge_type = jnp.concatenate([
        jnp.zeros_like(src0), jnp.ones_like(src1), 2 * jnp.ones_like(src2)])

    # deterministic parameters (synthetic init, matches module shapes)
    params = {"proj": {}, "convs": []}
    k = 2
    for nt in node_types:
        params["proj"][nt] = (
            0.1 * jax.random.normal(keys[k], (in_dims[nt], hidden_dim),
                                    jnp.float32),
            0.01 * jax.random.normal(keys[k + 1], (hidden_dim,), jnp.float32),
        )
        k += 2
    layer_dims = [(hidden_dim, hidden_dim)] * (num_layers - 1) + \
                 [(hidden_dim, out_dim)]
    for (f_in, f_out) in layer_dims:
        comp = 0.1 * jax.random.normal(keys[k], (num_relations, num_bases),
                                       jnp.float32)
        basis = 0.1 * jax.random.normal(keys[k + 1],
                                        (num_bases, f_in, f_out), jnp.float32)
        root = 0.1 * jax.random.normal(keys[k + 2], (f_in, f_out), jnp.float32)
        bias = jnp.zeros((f_out,), jnp.float32)
        params["convs"].append((comp, basis, root, bias))
        k += 3

    # tile_rows=16 forces multiple dst tiles + padded node rows at this toy size,
    # exercising the parallel tiling and the padded-row masking paths.
    out, latents = pairnorm_rgcn_forward(
        x_dict, params, edge_index, edge_type, num_relations, node_types,
        hidden_dim, out_dim, tile_rows=16)
    jax.block_until_ready(out)
    for lat in latents:
        jax.block_until_ready(lat)

    assert out.shape == (num_nodes, out_dim)
    assert latents[0].shape == (num_nodes, hidden_dim)
    assert latents[1].shape == (num_nodes, hidden_dim)

    # correctness check against the pure-JAX f32 reference
    # (tolerance loosened for the bf16 activation / weight / adjacency path)
    ref_out, ref_lats = reference_forward(x_dict, params, edge_index, edge_type,
                                          num_relations, node_types,
                                          hidden_dim, out_dim)
    assert jnp.allclose(out, ref_out, atol=3e-2, rtol=3e-2), "output mismatch"
    for lat, ref in zip(latents, ref_lats):
        assert jnp.allclose(lat, ref, atol=3e-2, rtol=3e-2), "latent mismatch"

    print("KERNEL_OK")
</pallas_src>

<mosaic_0001>
module attributes {stable_mosaic.version = 11 : i64} {
  func.func @_probe_kernel(%arg0: i32, %arg1: memref<8x128xf32, #tpu.memory_space<vmem>>, %arg2: memref<8x128xf32, #tpu.memory_space<vmem>>) attributes {dimension_semantics = [#tpu.dimension_semantics<arbitrary>], iteration_bounds = array<i64: 2>, scalar_prefetch = 0 : i64, scratch_operands = 0 : i64, tpu.core_type = #tpu.core_type<tc>, window_params = [{pipeline_mode = #tpu.pipeline_mode<synchronous>, transform_indices = @transform_0, window_bounds = array<i64: 8, 128>}, {pipeline_mode = #tpu.pipeline_mode<synchronous>, transform_indices = @transform_1, window_bounds = array<i64: 8, 128>}]} {
    %c0 = arith.constant 0 : index
    %c0_0 = arith.constant 0 : index
    %0 = vector.load %arg1[%c0, %c0_0] : memref<8x128xf32, #tpu.memory_space<vmem>>, vector<8x128xf32>
    %cst = arith.constant 2.000000e+00 : f32
    %1 = vector.broadcast %cst : f32 to vector<8x128xf32>
    %2 = arith.mulf %0, %1 : vector<8x128xf32>
    %c0_1 = arith.constant 0 : index
    %c0_2 = arith.constant 0 : index
    %3 = vector.load %arg2[%c0_1, %c0_2] : memref<8x128xf32, #tpu.memory_space<vmem>>, vector<8x128xf32>
    tpu.vector_store %arg2[%c0_1, %c0_2], %2 {strides = array<i32>} : memref<8x128xf32, #tpu.memory_space<vmem>>, vector<8x128xf32>,
    return
  }
  func.func @transform_0(%arg0: i32) -> (i32, i32) {
    %c0_i32 = arith.constant 0 : i32
    %c0_i32_0 = arith.constant 0 : i32
    %c0_i32_1 = arith.constant 0 : i32
    return %c0_i32, %c0_i32_0 : i32, i32
  }
  func.func @transform_1(%arg0: i32) -> (i32, i32) {
    %c0_i32 = arith.constant 0 : i32
    %c0_i32_0 = arith.constant 0 : i32
    %c0_i32_1 = arith.constant 0 : i32
    return %c0_i32, %c0_i32_0 : i32, i32
  }
}

module attributes {stable_mosaic.version = 11 : i64} {
  func.func @_proj_kernel(%arg0: i32, %arg1: memref<16x128xbf16, #tpu.memory_space<vmem>>, %arg2: memref<128x128xbf16, #tpu.memory_space<vmem>>, %arg3: memref<16x128xbf16, #tpu.memory_space<vmem>>) attributes {dimension_semantics = [#tpu.dimension_semantics<parallel>], iteration_bounds = array<i64: 2>, scalar_prefetch = 0 : i64, scratch_operands = 0 : i64, tpu.core_type = #tpu.core_type<tc>, window_params = [{transform_indices = @transform_0, window_bounds = array<i64: 16, 128>}, {pipeline_mode = #tpu.pipeline_mode<synchronous>, transform_indices = @transform_1, window_bounds = array<i64: 128, 128>}, {transform_indices = @transform_2, window_bounds = array<i64: 16, 128>}]} {
    %c0 = arith.constant 0 : index
    %c0_0 = arith.constant 0 : index
    %0 = vector.load %arg1[%c0, %c0_0] : memref<16x128xbf16, #tpu.memory_space<vmem>>, vector<16x128xbf16>
    %c0_1 = arith.constant 0 : index
    %c0_2 = arith.constant 0 : index
    %1 = vector.load %arg2[%c0_1, %c0_2] : memref<128x128xbf16, #tpu.memory_space<vmem>>, vector<128x128xbf16>
    %cst = arith.constant dense<0.000000e+00> : vector<16x128xf32>
    %2 = tpu.matmul %0, %1, %cst {dimension_numbers = #tpu.dot_dimension_numbers<[1], [0], [0], [1], [0, 0, 1, 1], [], []>} : vector<16x128xbf16>, vector<128x128xbf16>, vector<16x128xf32> -> vector<16x128xf32>
    %cst_3 = arith.constant 0.000000e+00 : f32
    %3 = vector.broadcast %cst_3 : f32 to vector<16x128xf32>
    %4 = arith.maximumf %2, %3 : vector<16x128xf32>
    %5 = arith.truncf %4 : vector<16x128xf32> to vector<16x128xbf16>
    %c0_4 = arith.constant 0 : index
    %c0_5 = arith.constant 0 : index
    %6 = vector.load %arg3[%c0_4, %c0_5] : memref<16x128xbf16, #tpu.memory_space<vmem>>, vector<16x128xbf16>
    tpu.vector_store %arg3[%c0_4, %c0_5], %5 {strides = array<i32>} : memref<16x128xbf16, #tpu.memory_space<vmem>>, vector<16x128xbf16>,
    return
  }
  func.func @transform_0(%arg0: i32) -> (i32, i32) {
    %c0_i32 = arith.constant 0 : i32
    %c0_i32_0 = arith.constant 0 : i32
    return %arg0, %c0_i32 : i32, i32
  }
  func.func @transform_1(%arg0: i32) -> (i32, i32) {
    %c0_i32 = arith.constant 0 : i32
    %c0_i32_0 = arith.constant 0 : i32
    %c0_i32_1 = arith.constant 0 : i32
    return %c0_i32, %c0_i32_0 : i32, i32
  }
  func.func @transform_2(%arg0: i32) -> (i32, i32) {
    %c0_i32 = arith.constant 0 : i32
    %c0_i32_0 = arith.constant 0 : i32
    return %arg0, %c0_i32 : i32, i32
  }
}

</mosaic_0001>

<llo_original>
// kernel: tpu_custom_call.1
$region0: #{tpu_custom_call.1}
  #allocation0 [shape = 'u32[]', space=smem, size = 0x4, offset = 0x4, fixed_abs, tag = 'smem constant byte address 0x4 - core index']
  #allocation1 [shape = 'u32[144,128]{1,0:T(1,128)}', space=vmem, size = 0x12000, scoped, tag = 'internal scratch']
  %s0 = inlined_call_operand.hbm [shape: f32[8,128], index: 0, kind: input, shape index: {}]
  %s1 = inlined_call_operand.hbm [shape: f32[8,128], index: 1, kind: output, shape index: {}]
  %s2 = sld [smem:[#allocation0]]
  $region41: #{tpu_custom_call.1} parent=0
    _
  %s4 = ssub.s32 1, %s2
  %s5 = scalar_select 0, %s4, %s2
  $region1: #{tpu_custom_call.1} parent=0
    #allocation2 [shape = 'u8[4096]{0}', space=vmem, size = 0x1000, scoped, tag = 'input window, operand 0, single buffered']
    #allocation3 [shape = 's32[2]{0}', space=sflag, size = 0x8, scoped, tag = 'scoped memory for tpu_custom_call.1']
    #allocation4 [shape = 's32[2]{0}', space=sflag, size = 0x8, scoped, tag = 'scoped memory for tpu_custom_call.1']
    #allocation5 [shape = 'u8[4096]{0}', space=vmem, size = 0x1000, scoped, tag = 'output window, operand 0, single buffered']
    %6 = vsyncpa [#allocation3], 0
    %7 = vsyncpa [#allocation4], 0
    loop: start=0, step=1, limit=4
    $region2: #{tpu_custom_call.1} parent=1 // loop_pre_header
      _
    $region3: #{tpu_custom_call.1} parent=1 // loop_header
      %s9 = sphi 0, %s13
      %p10 = scmp.ge.s32.totalorder %s9, 4
      %s17 = sphi 0, %s17
      %s19 = sphi 0, %s17
      %s20 = sphi 0, %s19
      %s34 = sphi 0, %s20
      %s38 = sphi 0, %s38
      %s40 = sphi 0, %s38
      %s41 = sphi 0, %s40
      %s55 = sphi 0, %s41
    $region4: #{tpu_custom_call.1} parent=1 // loop_header_branch
      %12 = sbr.rel (%p10) target = $region8
    $region5: #{tpu_custom_call.1} parent=1 // loop_body
      %s14 = ssub.s32 %s9, 1
      %s15 = ssub.s32 %s9, 2
      %s16 = sadd.s32 %s9, 1
      %s18 = sadd.s32 %s17, 1
      %p21 = scmp.eq.s32.totalorder %s9, 1
      %p22 = scmp.ne.s32.totalorder %s17, %s19
      %p23 = scmp.eq.s32.totalorder %s9, 0
      %p24 = por %p22, %p23
      %p25 = scmp.ne.s32.totalorder %s17, %s19
      %p26 = scmp.eq.s32.totalorder %s14, 1
      %p27 = por %p25, %p26
      %p28 = scmp.ne.s32.totalorder %s19, %s20
      %p29 = scmp.eq.s32.totalorder %s14, 0
      %p30 = por %p28, %p29
      %p31 = scmp.ne.s32.totalorder %s19, %s20
      %p32 = scmp.eq.s32.totalorder %s15, 1
      %p33 = por %p31, %p32
      %p35 = scmp.ne.s32.totalorder %s20, %s34
      %p36 = scmp.eq.s32.totalorder %s15, 0
      %p37 = por %p35, %p36
      %s39 = sadd.s32 %s38, 1
      %p42 = scmp.eq.s32.totalorder %s9, 1
      %p43 = scmp.ne.s32.totalorder %s38, %s40
      %p44 = scmp.eq.s32.totalorder %s9, 0
      %p45 = por %p43, %p44
      %p46 = scmp.ne.s32.totalorder %s38, %s40
      %p47 = scmp.eq.s32.totalorder %s14, 1
      %p48 = por %p46, %p47
      %p49 = scmp.ne.s32.totalorder %s40, %s41
      %p50 = scmp.eq.s32.totalorder %s14, 0
      %p51 = por %p49, %p50
      %p52 = scmp.ne.s32.totalorder %s40, %s41
      %p53 = scmp.eq.s32.totalorder %s15, 1
      %p54 = por %p52, %p53
      %p56 = scmp.ne.s32.totalorder %s41, %s55
      %p57 = scmp.eq.s32.totalorder %s15, 0
      %p58 = por %p56, %p57
      %p59 = scmp.le.s32.totalorder 1, %s9
      %p60 = scmp.lt.s32.totalorder %s9, 3
      %p61 = pnand %p59, %p60
      %p62 = pneg %p61
      // Predicated region
      $region9: #{tpu_custom_call.1} parent=5 // pred_check
        _
      $region10: #{tpu_custom_call.1} parent=5 // pred_check_branch
        %64 = sbr.rel (%p61) target = $region12
      $region11: #{tpu_custom_call.1} parent=5 // pred_region
        %s65 = ssub.s32 %s9, 1
        // Predicated region
        $region13: #{tpu_custom_call.1} parent=11 // pred_check
          %p66 = pneg %p30
        $region14: #{tpu_custom_call.1} parent=11 // pred_check_branch
          %68 = sbr.rel (%p66) target = $region16
        $region15: #{tpu_custom_call.1} parent=11 // pred_region
          %s70 = ssub.s32 128, 128
          %71 = vsyncadd [#allocation3], %s70
          %s73 = sshll.u32 [#allocation2], 4
          %s74 = int_to_ptr.vmem [resolvable:$true] %s73
          %76 = dma.hbm_to_vmem [thread:$0]  %s0, 128, %s74, [#allocation3]
        $region16: #{tpu_custom_call.1} parent=11 // pred_fallthru
          _
      $region12: #{tpu_custom_call.1} parent=5 // pred_fallthru
        _
      %p77 = scmp.lt.s32.totalorder %s9, 2
      // Predicated region
      $region17: #{tpu_custom_call.1} parent=5 // pred_check
        %p78 = pneg %p77
      $region18: #{tpu_custom_call.1} parent=5 // pred_check_branch
        %80 = sbr.rel (%p78) target = $region20
      $region19: #{tpu_custom_call.1} parent=5 // pred_region
        _
      $region20: #{tpu_custom_call.1} parent=5 // pred_fallthru
        _
      %p81 = scmp.le.s32.totalorder 1, %s9
      %p82 = scmp.lt.s32.totalorder %s9, 3
      %p83 = pnand %p81, %p82
      %p84 = pneg %p83
      // Predicated region
      $region21: #{tpu_custom_call.1} parent=5 // pred_check
        _
      $region22: #{tpu_custom_call.1} parent=5 // pred_check_branch
        %86 = sbr.rel (%p83) target = $region24
      $region23: #{tpu_custom_call.1} parent=5 // pred_region
        %s87 = ssub.s32 %s9, 1
        // Predicated region
        $region25: #{tpu_custom_call.1} parent=23 // pred_check
          %p88 = pneg %p30
        $region26: #{tpu_custom_call.1} parent=23 // pred_check_branch
          %90 = sbr.rel (%p88) target = $region28
        $region27: #{tpu_custom_call.1} parent=23 // pred_region
          %91 = dma.done [#allocation3], 128
        $region28: #{tpu_custom_call.1} parent=23 // pred_fallthru
          _
        %p92 = pneg %p30
        %p93 = pneg %p27
        %p94 = pneg %p51
        %p95 = pneg %p48
        %v96 = vld [vmem:[#allocation2] sm:$0xff]
        %v97 = vmul.f32 %v96, 2.0
        %98 = vst [vmem:[#allocation5] sm:$0xff] %v97
        // Predicated region
        $region29: #{tpu_custom_call.1} parent=23 // pred_check
          %p99 = pneg %p48
        $region30: #{tpu_custom_call.1} parent=23 // pred_check_branch
          %101 = sbr.rel (%p99) target = $region32
        $region31: #{tpu_custom_call.1} parent=23 // pred_region
          %s103 = ssub.s32 128, 128
          %104 = vsyncadd [#allocation4], %s103
          %s106 = sshll.u32 [#allocation5], 4
          %s107 = int_to_ptr.vmem [resolvable:$true] %s106
          %109 = dma.vmem_to_hbm [thread:$0]  %s107, 128, %s1, [#allocation4]
        $region32: #{tpu_custom_call.1} parent=23 // pred_fallthru
          _
        // Predicated region
        $region33: #{tpu_custom_call.1} parent=23 // pred_check
          %p110 = pneg %p48
        $region34: #{tpu_custom_call.1} parent=23 // pred_check_branch
          %112 = sbr.rel (%p110) target = $region36
        $region35: #{tpu_custom_call.1} parent=23 // pred_region
          %113 = dma.done [#allocation4], 128
        $region36: #{tpu_custom_call.1} parent=23 // pred_fallthru
          _
      $region24: #{tpu_custom_call.1} parent=5 // pred_fallthru
        _
      %p114 = scmp.le.s32.totalorder 2, %s9
      // Predicated region
      $region37: #{tpu_custom_call.1} parent=5 // pred_check
        %p115 = pneg %p114
      $region38: #{tpu_custom_call.1} parent=5 // pred_check_branch
        %117 = sbr.rel (%p115) target = $region40
      $region39: #{tpu_custom_call.1} parent=5 // pred_region
        %s118 = ssub.s32 %s9, 2
      $region40: #{tpu_custom_call.1} parent=5 // pred_fallthru
        _
    $region6: #{tpu_custom_call.1} parent=1 // loop_footer
      %s13 = sadd.s32 1, %s9
    $region7: #{tpu_custom_call.1} parent=1 // loop_footer_branch
      %8 = sbr.rel target = $region3
    $region8: #{tpu_custom_call.1} parent=1 // loop_exit
      _
    %119 = vsyncpa [#allocation3], 1
    %s120 = scalar_lea.sflag [#allocation3], 1
    %121 = vsyncpa %s120, 1
    %122 = vsyncpa [#allocation4], 1
    %s123 = scalar_lea.sflag [#allocation4], 1
    %124 = vsyncpa %s123, 1

// kernel: tpu_custom_call.1
$region0: #{tpu_custom_call.1}
  #allocation0 [shape = 'u32[]', space=smem, size = 0x4, offset = 0x4, fixed_abs, tag = 'smem constant byte address 0x4 - core index']
  #allocation1 [shape = 'u32[144,128]{1,0:T(1,128)}', space=vmem, size = 0x12000, scoped, tag = 'internal scratch']
  %s0 = inlined_call_operand.hbm [shape: bf16[32,128], index: 0, kind: input, shape index: {}]
  %s1 = inlined_call_operand.hbm [shape: bf16[128,128], index: 1, kind: input, shape index: {}]
  %s2 = inlined_call_operand.hbm [shape: bf16[32,128], index: 2, kind: output, shape index: {}]
  %s3 = sld [smem:[#allocation0]]
  $region49: #{tpu_custom_call.1} parent=0
    _
  %s5 = ssub.s32 1, %s3
  %s6 = scalar_select 0, %s5, %s3
  $region1: #{tpu_custom_call.1} parent=0
    #allocation2 [shape = 'u8[8192]{0}', space=vmem, size = 0x2000, scoped, tag = 'input window, operand 0']
    #allocation3 [shape = 's32[2]{0}', space=sflag, size = 0x8, scoped, tag = 'scoped memory for tpu_custom_call.1']
    #allocation4 [shape = 's32[2]{0}', space=sflag, size = 0x8, scoped, tag = 'scoped memory for tpu_custom_call.1']
    #allocation5 [shape = 'u8[32768]{0}', space=vmem, size = 0x8000, scoped, tag = 'input window, operand 1, single buffered']
    #allocation6 [shape = 's32[1]{0}', space=sflag, size = 0x4, scoped, tag = 'scoped memory for tpu_custom_call.1']
    #allocation7 [shape = 'u8[8192]{0}', space=vmem, size = 0x2000, scoped, tag = 'output window, operand 0']
    %7 = vsyncpa [#allocation3], 0
    %s8 = scalar_lea.sflag [#allocation3], 1
    %9 = vsyncpa %s8, 0
    %10 = vsyncpa [#allocation6], 0
    %11 = vsyncpa [#allocation4], 0
    %s12 = scalar_lea.sflag [#allocation4], 1
    %13 = vsyncpa %s12, 0
    loop: start=0, step=1, limit=4
    $region2: #{tpu_custom_call.1} parent=1 // loop_pre_header
      _
    $region3: #{tpu_custom_call.1} parent=1 // loop_header
      %s15 = sphi 0, %s19
      %p16 = scmp.ge.s32.totalorder %s15, 4
      %s25 = sphi 0, %s27
      %s28 = sphi 0, %s25
      %s29 = sphi 0, %s28
      %s45 = sphi 0, %s29
      %s49 = sphi 0, %s49
      %s51 = sphi 0, %s49
      %s52 = sphi 0, %s51
      %s66 = sphi 0, %s52
      %s72 = sphi 0, %s74
      %s75 = sphi 0, %s72
      %s76 = sphi 0, %s75
      %s92 = sphi 0, %s76
    $region4: #{tpu_custom_call.1} parent=1 // loop_header_branch
      %18 = sbr.rel (%p16) target = $region8
    $region5: #{tpu_custom_call.1} parent=1 // loop_body
      %s20 = ssub.s32 %s15, 1
      %s21 = ssub.s32 %s15, 2
      %s22 = sadd.s32 %s15, 1
      %s23 = ssub.s32 %s15, %s22
      %p24 = scmp.eq.s32.totalorder %s23, 0
      %s26 = sadd.s32 %s25, 1
      %s27 = scalar_select %p24, %s25, %s26
      %p30 = pneg %p24
      %p31 = scmp.eq.s32.totalorder %s15, 1
      %p32 = por %p30, %p31
      %p33 = scmp.ne.s32.totalorder %s25, %s28
      %p34 = scmp.eq.s32.totalorder %s15, 0
      %p35 = por %p33, %p34
      %p36 = scmp.ne.s32.totalorder %s25, %s28
      %p37 = scmp.eq.s32.totalorder %s20, 1
      %p38 = por %p36, %p37
      %p39 = scmp.ne.s32.totalorder %s28, %s29
      %p40 = scmp.eq.s32.totalorder %s20, 0
      %p41 = por %p39, %p40
      %p42 = scmp.ne.s32.totalorder %s28, %s29
      %p43 = scmp.eq.s32.totalorder %s21, 1
      %p44 = por %p42, %p43
      %p46 = scmp.ne.s32.totalorder %s29, %s45
      %p47 = scmp.eq.s32.totalorder %s21, 0
      %p48 = por %p46, %p47
      %s50 = sadd.s32 %s49, 1
      %p53 = scmp.eq.s32.totalorder %s15, 1
      %p54 = scmp.ne.s32.totalorder %s49, %s51
      %p55 = scmp.eq.s32.totalorder %s15, 0
      %p56 = por %p54, %p55
      %p57 = scmp.ne.s32.totalorder %s49, %s51
      %p58 = scmp.eq.s32.totalorder %s20, 1
      %p59 = por %p57, %p58
      %p60 = scmp.ne.s32.totalorder %s51, %s52
      %p61 = scmp.eq.s32.totalorder %s20, 0
      %p62 = por %p60, %p61
      %p63 = scmp.ne.s32.totalorder %s51, %s52
      %p64 = scmp.eq.s32.totalorder %s21, 1
      %p65 = por %p63, %p64
      %p67 = scmp.ne.s32.totalorder %s52, %s66
      %p68 = scmp.eq.s32.totalorder %s21, 0
      %p69 = por %p67, %p68
      %s70 = ssub.s32 %s15, %s22
      %p71 = scmp.eq.s32.totalorder %s70, 0
      %s73 = sadd.s32 %s72, 1
      %s74 = scalar_select %p71, %s72, %s73
      %p77 = pneg %p71
      %p78 = scmp.eq.s32.totalorder %s15, 1
      %p79 = por %p77, %p78
      %p80 = scmp.ne.s32.totalorder %s72, %s75
      %p81 = scmp.eq.s32.totalorder %s15, 0
      %p82 = por %p80, %p81
      %p83 = scmp.ne.s32.totalorder %s72, %s75
      %p84 = scmp.eq.s32.totalorder %s20, 1
      %p85 = por %p83, %p84
      %p86 = scmp.ne.s32.totalorder %s75, %s76
      %p87 = scmp.eq.s32.totalorder %s20, 0
      %p88 = por %p86, %p87
      %p89 = scmp.ne.s32.totalorder %s75, %s76
      %p90 = scmp.eq.s32.totalorder %s21, 1
      %p91 = por %p89, %p90
      %p93 = scmp.ne.s32.totalorder %s76, %s92
      %p94 = scmp.eq.s32.totalorder %s21, 0
      %p95 = por %p93, %p94
      %p96 = scmp.le.s32.totalorder 1, %s15
      %p97 = scmp.lt.s32.totalorder %s15, 3
      %p98 = pnand %p96, %p97
      %p99 = pneg %p98
      // Predicated region
      $region9: #{tpu_custom_call.1} parent=5 // pred_check
        _
      $region10: #{tpu_custom_call.1} parent=5 // pred_check_branch
        %101 = sbr.rel (%p98) target = $region12
      $region11: #{tpu_custom_call.1} parent=5 // pred_region
        %s102 = ssub.s32 %s15, 1
        // Predicated region
        $region13: #{tpu_custom_call.1} parent=11 // pred_check
          %p103 = pneg %p62
        $region14: #{tpu_custom_call.1} parent=11 // pred_check_branch
          %105 = sbr.rel (%p103) target = $region16
        $region15: #{tpu_custom_call.1} parent=11 // pred_region
          %s107 = ssub.s32 1024, 1024
          %108 = vsyncadd [#allocation6], %s107
          %s109 = sshll.u32 [#allocation5], 4
          %s110 = int_to_ptr.vmem [resolvable:$true] %s109
          %115 = dma.hbm_to_vmem [thread:$0]  %s1, 1024, %s110, [#allocation6], 64, 64, 4
        $region16: #{tpu_custom_call.1} parent=11 // pred_fallthru
          _
      $region12: #{tpu_custom_call.1} parent=5 // pred_fallthru
        _
      %p116 = scmp.lt.s32.totalorder %s15, 2
      // Predicated region
      $region17: #{tpu_custom_call.1} parent=5 // pred_check
        %p117 = pneg %p116
      $region18: #{tpu_custom_call.1} parent=5 // pred_check_branch
        %119 = sbr.rel (%p117) target = $region20
      $region19: #{tpu_custom_call.1} parent=5 // pred_region
        // Predicated region
        $region21: #{tpu_custom_call.1} parent=19 // pred_check
          %p120 = pneg %p35
        $region22: #{tpu_custom_call.1} parent=19 // pred_check_branch
          %122 = sbr.rel (%p120) target = $region24
        $region23: #{tpu_custom_call.1} parent=19 // pred_region
          %s123 = sand.u32 %s25, 1
          %s124 = scalar_lea.sflag [#allocation3], %s123
          %s125 = sand.u32 %s25, 1
          %s126 = smul.addr %s125, 8
          %s127 = scalar_lea.vmem [#allocation2], %s126
          %s128 = smul.u32 2, %s15
          %s130 = ssub.s32 128, 128
          %131 = vsyncadd %s124, %s130
          %s132 = smul.addr %s128, 64
          %s133 = scalar_lea.hbm %s0, %s132
          %s134 = sshll.u32 %s127, 4
          %s135 = int_to_ptr.vmem [resolvable:$true] %s134
          %140 = dma.hbm_to_vmem [thread:$0]  %s133, 128, %s135, %s124, 64, 64, 4
        $region24: #{tpu_custom_call.1} parent=19 // pred_fallthru
          _
      $region20: #{tpu_custom_call.1} parent=5 // pred_fallthru
        _
      %p141 = scmp.le.s32.totalorder 1, %s15
      %p142 = scmp.lt.s32.totalorder %s15, 3
      %p143 = pnand %p141, %p142
      %p144 = pneg %p143
      // Predicated region
      $region25: #{tpu_custom_call.1} parent=5 // pred_check
        _
      $region26: #{tpu_custom_call.1} parent=5 // pred_check_branch
        %146 = sbr.rel (%p143) target = $region28
      $region27: #{tpu_custom_call.1} parent=5 // pred_region
        %s147 = ssub.s32 %s15, 1
        %s148 = sand.u32 %s28, 1
        %s149 = scalar_lea.sflag [#allocation3], %s148
        %s150 = sand.u32 %s28, 1
        %s151 = smul.addr %s150, 8
        %s152 = scalar_lea.vmem [#allocation2], %s151
        // Predicated region
        $region29: #{tpu_custom_call.1} parent=27 // pred_check
          %p153 = pneg %p41
        $region30: #{tpu_custom_call.1} parent=27 // pred_check_branch
          %155 = sbr.rel (%p153) target = $region32
        $region31: #{tpu_custom_call.1} parent=27 // pred_region
          %156 = dma.done %s149, 128
        $region32: #{tpu_custom_call.1} parent=27 // pred_fallthru
          _
        // Predicated region
        $region33: #{tpu_custom_call.1} parent=27 // pred_check
          %p157 = pneg %p62
        $region34: #{tpu_custom_call.1} parent=27 // pred_check_branch
          %159 = sbr.rel (%p157) target = $region36
        $region35: #{tpu_custom_call.1} parent=27 // pred_region
          %160 = dma.done [#allocation6], 1024
        $region36: #{tpu_custom_call.1} parent=27 // pred_fallthru
          _
        %s161 = sand.u32 %s28, 1
        %s162 = scalar_lea.sflag [#allocation3], %s161
        %s163 = sand.u32 %s28, 1
        %s164 = smul.addr %s163, 8
        %s165 = scalar_lea.vmem [#allocation2], %s164
        %p166 = pneg %p41
        %p167 = pneg %p38
        %p168 = pneg %p62
        %p169 = pneg %p59
        %p170 = pneg %p88
        %p171 = pneg %p85
        %s172 = sand.u32 %s75, 1
        %s173 = scalar_lea.sflag [#allocation4], %s172
        %s174 = sand.u32 %s75, 1
        %s175 = smul.addr %s174, 8
        %s176 = scalar_lea.vmem [#allocation7], %s175
        %s177 = smul.u32 2, %s20
        %s178 = smul.u32 2, %s20
        %v180 = vld [vmem:[%s152] sm:$0xf]
        %v181 = vld [vmem:[%s152 + $0x4] sm:$0xf]
        %v182 = vld [vmem:[#allocation5] sm:$0xf]
        %v183 = vld [vmem:[#allocation5 + $0x4] sm:$0xf]
        %v184 = vld [vmem:[#allocation5 + $0x8] sm:$0xf]
        %v185 = vld [vmem:[#allocation5 + $0xc] sm:$0xf]
        %v186 = vld [vmem:[#allocation5 + $0x10] sm:$0xf]
        %v187 = vld [vmem:[#allocation5 + $0x14] sm:$0xf]
        %v188 = vld [vmem:[#allocation5 + $0x18] sm:$0xf]
        %v189 = vld [vmem:[#allocation5 + $0x1c] sm:$0xf]
        %v190 = vld [vmem:[#allocation5 + $0x20] sm:$0xf]
        %v191 = vld [vmem:[#allocation5 + $0x24] sm:$0xf]
        %v192 = vld [vmem:[#allocation5 + $0x28] sm:$0xf]
        %v193 = vld [vmem:[#allocation5 + $0x2c] sm:$0xf]
        %v194 = vld [vmem:[#allocation5 + $0x30] sm:$0xf]
        %v195 = vld [vmem:[#allocation5 + $0x34] sm:$0xf]
        %v196 = vld [vmem:[#allocation5 + $0x38] sm:$0xf]
        %v197 = vld [vmem:[#allocation5 + $0x3c] sm:$0xf]
        %v200 = vunpack.c.l.b16 %v180
        %v201 = vunpack.c.l.b16 %v181
        %v202 = vpack.c.b16 %v201, %v200
        %v220 = vunpack.c.l.b16 %v182
        %v221 = vunpack.c.l.b16 %v183
        %v222 = vunpack.c.l.b16 %v184
        %v223 = vunpack.c.l.b16 %v185
        %v224 = vunpack.c.l.b16 %v186
        %v225 = vunpack.c.l.b16 %v187
        %v226 = vunpack.c.l.b16 %v188
        %v227 = vunpack.c.l.b16 %v189
        %v228 = vunpack.c.l.b16 %v190
        %v229 = vunpack.c.l.b16 %v191
        %v230 = vunpack.c.l.b16 %v192
        %v231 = vunpack.c.l.b16 %v193
        %v232 = vunpack.c.l.b16 %v194
        %v233 = vunpack.c.l.b16 %v195
        %v234 = vunpack.c.l.b16 %v196
        %v235 = vunpack.c.l.b16 %v197
        %v236 = vpack.c.b16 %v221, %v220
        %v237 = vpack.c.b16 %v223, %v222
        %v238 = vpack.c.b16 %v225, %v224
        %v239 = vpack.c.b16 %v227, %v226
        %v240 = vpack.c.b16 %v229, %v228
        %v241 = vpack.c.b16 %v231, %v230
        %v242 = vpack.c.b16 %v233, %v232
        %v243 = vpack.c.b16 %v235, %v234
        %252 = vmatprep.subr.bf16.mxu0 0
        %253 = vmatpush1.bf16.msra.mxu0 %v236
        %254 = vmatprep.subr.bf16.mxu0 0
        %255 = vmatpush1.bf16.msra.mxu0 %v237
        %256 = vmatprep.subr.bf16.mxu0 0
        %257 = vmatpush1.bf16.msra.mxu0 %v238
        %258 = vmatprep.subr.bf16.mxu0 0
        %259 = vmatpush1.bf16.msra.mxu0 %v239
        %260 = vmatprep.subr.bf16.mxu0 0
        %261 = vmatpush1.bf16.msra.mxu0 %v240
        %262 = vmatprep.subr.bf16.mxu0 0
        %263 = vmatpush1.bf16.msra.mxu0 %v241
        %264 = vmatprep.subr.bf16.mxu0 0
        %265 = vmatpush1.bf16.msra.mxu0 %v242
        %266 = vmatprep.subr.bf16.mxu0 0
        %267 = vmatpush1.bf16.msra.mxu0 %v243
        %268 = vmatprep.subr.bf16.mxu0 0
        %269 = vmatpush1.bf16.msra.mxu0 0
        %270 = vmatprep.subr.bf16.mxu0 0
        %271 = vmatpush1.bf16.msra.mxu0 0
        %272 = vmatprep.subr.bf16.mxu0 0
        %273 = vmatpush1.bf16.msra.mxu0 0
        %274 = vmatprep.subr.bf16.mxu0 0
        %275 = vmatpush1.bf16.msra.mxu0 0
        %276 = vmatprep.subr.bf16.mxu0 0
        %277 = vmatpush1.bf16.msra.mxu0 0
        %278 = vmatprep.subr.bf16.mxu0 0
        %279 = vmatpush1.bf16.msra.mxu0 0
        %280 = vmatprep.subr.bf16.mxu0 0
        %281 = vmatpush1.bf16.msra.mxu0 0
        %282 = vmatprep.subr.bf16.mxu0 0
        %283 = vmatpush1.bf16.msra.mxu0 0
        %284 = vmatprep.mubr.bf16.mxu0 0
        %285 = vmatmul.mubr.bf16.gmra.mrb[0].mxu0 %v202
        %v286 = vpop.f32.mrb[0].mxu0
        %v287 = vadd.f32 0.0, %v286
        %v288 = vpop.f32.mrb[0].mxu0
        %v289 = vpop.f32.mrb[0].mxu0
        %v290 = vadd.f32 0.0, %v289
        %v291 = vpop.f32.mrb[0].mxu0
        %292 = vdwg.mxu0
        %v293 = vmax.f32 %v287, 0.0
        %v294 = vmax.f32 %v290, 0.0
        %v295 = vpack.c.bf16 %v294, %v293
        %v297 = vunpack.c.l.b16 %v295
        %v298 = vunpack.c.h.b16 %v295
        %v299 = vpack.c.b16 %v297, %v297
        %v300 = vpack.c.b16 %v298, %v298
        %303 = vst [vmem:[%s176] sm:$0xf] %v299
        %304 = vst [vmem:[%s176 + $0x4] sm:$0xf] %v300
        %s305 = sand.u32 %s75, 1
        %s306 = scalar_lea.sflag [#allocation4], %s305
        %s307 = sand.u32 %s75, 1
        %s308 = smul.addr %s307, 8
        %s309 = scalar_lea.vmem [#allocation7], %s308
        // Predicated region
        $region37: #{tpu_custom_call.1} parent=27 // pred_check
          %p310 = pneg %p85
        $region38: #{tpu_custom_call.1} parent=27 // pred_check_branch
          %312 = sbr.rel (%p310) target = $region40
        $region39: #{tpu_custom_call.1} parent=27 // pred_region
          %s313 = smul.u32 2, %s20
          %s315 = ssub.s32 128, 128
          %316 = vsyncadd %s306, %s315
          %s317 = smul.addr %s313, 64
          %s318 = scalar_lea.hbm %s2, %s317
          %s319 = sshll.u32 %s309, 4
          %s320 = int_to_ptr.vmem [resolvable:$true] %s319
          %325 = dma.vmem_to_hbm [thread:$0]  %s320, 128, %s318, %s306, 64, 64, 4
        $region40: #{tpu_custom_call.1} parent=27 // pred_fallthru
          _
      $region28: #{tpu_custom_call.1} parent=5 // pred_fallthru
        _
      %p326 = scmp.le.s32.totalorder 2, %s15
      // Predicated region
      $region41: #{tpu_custom_call.1} parent=5 // pred_check
        %p327 = pneg %p326
      $region42: #{tpu_custom_call.1} parent=5 // pred_check_branch
        %329 = sbr.rel (%p327) target = $region44
      $region43: #{tpu_custom_call.1} parent=5 // pred_region
        %s330 = ssub.s32 %s15, 2
        // Predicated region
        $region45: #{tpu_custom_call.1} parent=43 // pred_check
          %p331 = pneg %p91
        $region46: #{tpu_custom_call.1} parent=43 // pred_check_branch
          %333 = sbr.rel (%p331) target = $region48
        $region47: #{tpu_custom_call.1} parent=43 // pred_region
          %s334 = sand.u32 %s76, 1
          %s335 = scalar_lea.sflag [#allocation4], %s334
          %s336 = sand.u32 %s76, 1
          %s337 = smul.addr %s336, 8
          %s338 = scalar_lea.vmem [#allocation7], %s337
          %339 = dma.done %s335, 128
        $region48: #{tpu_custom_call.1} parent=43 // pred_fallthru
          _
      $region44: #{tpu_custom_call.1} parent=5 // pred_fallthru
        _
    $region6: #{tpu_custom_call.1} parent=1 // loop_footer
      %s19 = sadd.s32 1, %s15
    $region7: #{tpu_custom_call.1} parent=1 // loop_footer_branch
      %14 = sbr.rel target = $region3
    $region8: #{tpu_custom_call.1} parent=1 // loop_exit
      _
    %340 = vsyncpa [#allocation3], 1
    %s341 = scalar_lea.sflag [#allocation3], 1
    %342 = vsyncpa %s341, 1
    %343 = vsyncpa [#allocation6], 1
    %344 = vsyncpa [#allocation4], 1
    %s345 = scalar_lea.sflag [#allocation4], 1
    %346 = vsyncpa %s345, 1

</llo_original>
